<compile_context>
chip_gen: v5e
topology: v5e:2x2
jax: 0.10.0
libtpu: 0.0.40
codegen_flags: <defaults>
</compile_context>

<pallas_src>
import functools
import math

import jax
import jax.numpy as jnp
from jax import lax
from jax.experimental import pallas as pl
from jax.experimental.pallas import tpu as pltpu

EPS = 1e-5
C_PAD = 128  # matmul output width (lane-dense); c_out <= 128 supported here


# --------------------------------------------------------------------------
# Kernels
# --------------------------------------------------------------------------
def _conv1_stats_kernel(x_ref, w_ref, h_ref, sum_ref, ssq_ref, *, seq_len, c_ch):
    # conv1 (k=3, pad=1) straight from the raw input tile: three small-K
    # matmuls, then the lane-dense (R, C_PAD) outputs are shifted by one row
    # with pltpu.roll and masked so taps never cross sequence boundaries.
    # Conv bias intentionally omitted: it cancels under train-mode BatchNorm.
    x = x_ref[...]
    rows = x.shape[0]
    z_prev = jnp.dot(x, w_ref[0], preferred_element_type=jnp.float32)  # tap x[l-1]
    z_mid = jnp.dot(x, w_ref[1], preferred_element_type=jnp.float32)   # tap x[l]
    z_next = jnp.dot(x, w_ref[2], preferred_element_type=jnp.float32)  # tap x[l+1]

    pos = lax.broadcasted_iota(jnp.int32, (rows, 1), 0) % seq_len
    acc = z_mid
    acc = acc + jnp.where(pos >= 1, pltpu.roll(z_prev, 1, 0), 0.0)
    acc = acc + jnp.where(pos <= seq_len - 2, pltpu.roll(z_next, rows - 1, 0), 0.0)

    h_ref[...] = acc[:, :c_ch].astype(h_ref.dtype)
    sum_ref[...] = jnp.sum(acc, axis=0, keepdims=True).reshape(1, 1, acc.shape[1])
    ssq_ref[...] = jnp.sum(acc * acc, axis=0, keepdims=True).reshape(1, 1, acc.shape[1])


def _bn_relu_conv2_stats_kernel(h1_ref, scale_ref, bias_ref, w_ref,
                                h2_ref, sum_ref, ssq_ref, *,
                                seq_len, mm_dtype, c_ch, tile_rows, valid_rows):
    # Folded BN1 (scale/bias precomputed in the wrapper) + ReLU in f32 on the
    # narrow (rows, c_ch) activation.  Rows belonging to batch-padding (fake)
    # sequences are zeroed so they do not contribute to the BN2 statistics.
    a32 = jnp.maximum(
        h1_ref[...].astype(jnp.float32) * scale_ref[...] + bias_ref[...], 0.0)
    rows = a32.shape[0]
    if valid_rows is not None:  # static: only when the batch was padded
        gidx = (pl.program_id(0) * tile_rows
                + lax.broadcasted_iota(jnp.int32, (rows, 1), 0))
        a32 = jnp.where(gidx < valid_rows, a32, 0.0)
    a = a32.astype(mm_dtype)

    # conv2 (bias dropped, cancels under BN2): same roll-the-outputs scheme.
    z_prev = jnp.dot(a, w_ref[0], preferred_element_type=jnp.float32)
    z_mid = jnp.dot(a, w_ref[1], preferred_element_type=jnp.float32)
    z_next = jnp.dot(a, w_ref[2], preferred_element_type=jnp.float32)

    pos = lax.broadcasted_iota(jnp.int32, (rows, 1), 0) % seq_len
    acc = z_mid
    acc = acc + jnp.where(pos >= 1, pltpu.roll(z_prev, 1, 0), 0.0)
    acc = acc + jnp.where(pos <= seq_len - 2, pltpu.roll(z_next, rows - 1, 0), 0.0)

    h2_ref[...] = acc[:, :c_ch].astype(h2_ref.dtype)
    sum_ref[...] = jnp.sum(acc, axis=0, keepdims=True).reshape(1, 1, acc.shape[1])
    ssq_ref[...] = jnp.sum(acc * acc, axis=0, keepdims=True).reshape(1, 1, acc.shape[1])


def _bn_relu_kernel(h2_ref, scale_ref, bias_ref, o_ref):
    # Folded BN2 + ReLU; pure streaming pass at c_out lanes only.
    o_ref[...] = jnp.maximum(
        h2_ref[...].astype(jnp.float32) * scale_ref[...] + bias_ref[...],
        0.0).astype(o_ref.dtype)


# --------------------------------------------------------------------------
# Wrapper helpers
# --------------------------------------------------------------------------
def _round_up(v, m):
    return -(-v // m) * m


def _plan_tiles(n, seq_len, max_tile_rows):
    """Sequences per tile: whole sequences, row budget, sublane-aligned.
    The batch is padded up so every tile is full; fake rows are masked out of
    the BN statistics inside pass B."""
    spt = max(1, min(n, max(1, max_tile_rows // seq_len)))
    if n >= 8:                                   # keep >= ~8 grid steps so the
        spt = min(spt, _round_up(n, 8) // 8)     # pipeline / v7x megacore has work
    if spt >= n:
        return n, n                              # whole batch in a single tile
    # Multi-tile: tile_rows must be 8-row aligned (16 preferred for bf16 packing).
    m16 = 16 // math.gcd(seq_len, 16)
    m8 = 8 // math.gcd(seq_len, 8)
    m = m16 if m16 * seq_len <= max(max_tile_rows, m8 * seq_len) else m8
    spt = max(m, (spt // m) * m)
    n_pad = _round_up(n, spt)
    return spt, n_pad


def _vmem_limit_bytes():
    cap = 64 * 1024 * 1024
    try:
        cap = int(getattr(pltpu.get_tpu_info(), "vmem_capacity_bytes", cap))
    except Exception:
        pass
    # ~3/4 of physical VMEM: ~48 MiB on v7x (64 MiB), capped at 96 MiB on v5e/v6e.
    return max(32 * 1024 * 1024, min(cap * 3 // 4, 96 * 1024 * 1024))


def _fold_bn(sum_part, ssq_part, gamma_p, beta_p, count, c_ch):
    """Combine per-tile sum / sum-of-squares partials into folded BN scale/bias."""
    mean = jnp.sum(sum_part, axis=(0, 1))[:c_ch] / count
    var = jnp.maximum(jnp.sum(ssq_part, axis=(0, 1))[:c_ch] / count - mean * mean, 0.0)
    scale = gamma_p * lax.rsqrt(var + EPS)                   # (1, c_ch)
    bias = beta_p - mean * scale
    return scale.astype(jnp.float32), bias.astype(jnp.float32)


# --------------------------------------------------------------------------
# ConvBlock forward
# --------------------------------------------------------------------------
def conv_block(x_ncl, params, *, use_bf16=True, max_tile_rows=4096):
    """ConvBlock forward (train-mode BatchNorm).  params are torch-shaped
    (w1, b1, g1, beta1, w2, b2, g2, beta2); x is NCL; returns NCL (f32)."""
    n, c_in, seq_len = x_ncl.shape
    w1, _b1, g1, be1, w2, _b2, g2, be2 = params  # conv biases cancel under train BN
    c_out = w1.shape[0]
    if c_out > C_PAD:
        # TODO(synk): N-tile the matmuls for c_out > 128.
        raise NotImplementedError("c_out above 128 not supported here")

    c_in_p = _round_up(c_in, 8)    # K alignment for the conv1 matmuls
    c_ch = _round_up(c_out, 8)     # stored channel width for h1 / h2 / output

    spt, n_pad = _plan_tiles(n, seq_len, max_tile_rows)
    tile_rows = spt * seq_len
    num_tiles = n_pad // spt
    rows = n * seq_len             # real rows (BN statistics count)
    rows_p = n_pad * seq_len

    mm_dtype = jnp.bfloat16 if use_bf16 else jnp.float32    # MXU operand dtype
    store_dtype = jnp.bfloat16 if use_bf16 else jnp.float32  # h1/h2 HBM dtype
    f32 = jnp.float32

    # ---- wrapper-side prep (tiny tensors only: raw input + weights) ---------
    x_rows = jnp.transpose(x_ncl, (0, 2, 1)).astype(f32).reshape(rows, c_in)
    x_rows = jnp.pad(x_rows, ((0, rows_p - rows),
                              (0, c_in_p - c_in))).astype(mm_dtype)

    # torch Conv1d weight (C_out, C_in, K) -> per-tap (K, C_in_pad, C_PAD).
    w1_k = jnp.transpose(w1, (2, 1, 0)).astype(f32)
    w1_p = jnp.pad(w1_k, ((0, 0), (0, c_in_p - c_in),
                          (0, C_PAD - c_out))).astype(mm_dtype)
    w2_k = jnp.transpose(w2, (2, 1, 0)).astype(f32)
    w2_p = jnp.pad(w2_k, ((0, 0), (0, c_ch - c_out),
                          (0, C_PAD - c_out))).astype(mm_dtype)

    def pad_chan(v):
        return jnp.pad(v.astype(f32), (0, c_ch - c_out)).reshape(1, c_ch)

    g1p, be1p, g2p, be2p = map(pad_chan, (g1, be1, g2, be2))

    cparams = pltpu.CompilerParams(dimension_semantics=("parallel",),
                                   vmem_limit_bytes=_vmem_limit_bytes())
    grid = (num_tiles,)
    x_block = pl.BlockSpec((tile_rows, c_in_p), lambda i: (i, 0))
    h_block = pl.BlockSpec((tile_rows, c_ch), lambda i: (i, 0))
    chan_block = pl.BlockSpec((1, c_ch), lambda i: (0, 0))
    stats_block = pl.BlockSpec((1, 1, C_PAD), lambda i: (i, 0, 0))
    stats_shape = jax.ShapeDtypeStruct((num_tiles, 1, C_PAD), f32)
    valid_rows = rows if rows_p != rows else None

    # ---- pass A: conv1 + partial BN1 stats -----------------------------------
    h1, sum1, ssq1 = pl.pallas_call(
        functools.partial(_conv1_stats_kernel, seq_len=seq_len, c_ch=c_ch),
        out_shape=(jax.ShapeDtypeStruct((rows_p, c_ch), store_dtype),
                   stats_shape, stats_shape),
        grid=grid,
        in_specs=[x_block,
                  pl.BlockSpec((3, c_in_p, C_PAD), lambda i: (0, 0, 0))],
        out_specs=(h_block, stats_block, stats_block),
        compiler_params=cparams,
    )(x_rows, w1_p)
    scale1, bias1 = _fold_bn(sum1, ssq1, g1p, be1p, float(rows), c_ch)

    # ---- pass B: BN1 + ReLU + conv2 + partial BN2 stats -----------------------
    h2, sum2, ssq2 = pl.pallas_call(
        functools.partial(_bn_relu_conv2_stats_kernel, seq_len=seq_len,
                          mm_dtype=mm_dtype, c_ch=c_ch,
                          tile_rows=tile_rows, valid_rows=valid_rows),
        out_shape=(jax.ShapeDtypeStruct((rows_p, c_ch), store_dtype),
                   stats_shape, stats_shape),
        grid=grid,
        in_specs=[h_block, chan_block, chan_block,
                  pl.BlockSpec((3, c_ch, C_PAD), lambda i: (0, 0, 0))],
        out_specs=(h_block, stats_block, stats_block),
        compiler_params=cparams,
    )(h1, scale1, bias1, w2_p)
    scale2, bias2 = _fold_bn(sum2, ssq2, g2p, be2p, float(rows), c_ch)

    # ---- pass C: BN2 + ReLU -> output rows (c_out lanes only) ----------------
    y_rows = pl.pallas_call(
        _bn_relu_kernel,
        out_shape=jax.ShapeDtypeStruct((rows_p, c_ch), f32),
        grid=grid,
        in_specs=[h_block, chan_block, chan_block],
        out_specs=h_block,
        compiler_params=cparams,
    )(h2, scale2, bias2)

    # (rows, c_out) -> (N, C_out, L).
    # TODO(synk): fold this NLC->NCL transpose into pass C with an in-kernel
    # XLU transpose when L is lane-dense; it now only moves rows*c_out f32.
    # TODO(synk): BatchNorm running_mean/running_var buffer updates are state
    # mutation only (no effect on the forward output) and are not reproduced.
    out = y_rows[:rows, :c_out].reshape(n, seq_len, c_out)
    return jnp.transpose(out, (0, 2, 1))


# --------------------------------------------------------------------------
# Pure-JAX reference (same semantics as the PyTorch module in train mode)
# --------------------------------------------------------------------------
def conv_block_ref(x, params):
    w1, b1, g1, be1, w2, b2, g2, be2 = params

    def conv(v, w, b):
        y = lax.conv_general_dilated(v, w, window_strides=(1,), padding=((1, 1),),
                                     dimension_numbers=("NCH", "OIH", "NCH"))
        return y + b[None, :, None]

    def bn(v, g, be):
        mean = jnp.mean(v, axis=(0, 2), keepdims=True)
        var = jnp.mean((v - mean) ** 2, axis=(0, 2), keepdims=True)
        return (v - mean) * lax.rsqrt(var + EPS) * g[None, :, None] + be[None, :, None]

    h = jax.nn.relu(bn(conv(x, w1, b1), g1, be1))
    return jax.nn.relu(bn(conv(h, w2, b2), g2, be2))


if __name__ == "__main__":
    N, C_IN, C_OUT, L = 3, 4, 8, 16
    key = jax.random.PRNGKey(0)
    ks = jax.random.split(key, 9)

    x = jax.random.normal(ks[0], (N, C_IN, L), jnp.float32)
    w1 = 0.3 * jax.random.normal(ks[1], (C_OUT, C_IN, 3), jnp.float32)
    b1 = 0.1 * jax.random.normal(ks[2], (C_OUT,), jnp.float32)
    g1 = 1.0 + 0.1 * jax.random.normal(ks[3], (C_OUT,), jnp.float32)
    be1 = 0.1 * jax.random.normal(ks[4], (C_OUT,), jnp.float32)
    w2 = 0.3 * jax.random.normal(ks[5], (C_OUT, C_OUT, 3), jnp.float32)
    b2 = 0.1 * jax.random.normal(ks[6], (C_OUT,), jnp.float32)
    g2 = 1.0 + 0.1 * jax.random.normal(ks[7], (C_OUT,), jnp.float32)
    be2 = 0.1 * jax.random.normal(ks[8], (C_OUT,), jnp.float32)
    params = (w1, b1, g1, be1, w2, b2, g2, be2)

    ref = conv_block_ref(x, params)

    # f32 path, forced multi-tile (2 seqs/tile -> batch padded 3 -> 4, 2 tiles)
    # to exercise cross-tile BN statistics and the fake-row masking.  Tight tol.
    out = jax.block_until_ready(conv_block(x, params, use_bf16=False,
                                           max_tile_rows=32))
    assert out.shape == (N, C_OUT, L), out.shape
    err = float(jnp.max(jnp.abs(out - ref)))
    assert jnp.allclose(out, ref, atol=1e-4, rtol=1e-4), f"f32 max abs err = {err}"

    # Default path: bf16 intermediates / MXU operands (f32 accumulation & BN
    # math), whole batch in one tile.  Looser tolerance for bf16 rounding.
    out_bf = jax.block_until_ready(conv_block(x, params))
    err_bf = float(jnp.max(jnp.abs(out_bf - ref)))
    assert jnp.allclose(out_bf, ref, atol=1e-1, rtol=1e-1), \
        f"bf16 max abs err = {err_bf}"

    print("KERNEL_OK")
</pallas_src>

<mosaic_0001>
module attributes {stable_mosaic.version = 11 : i64} {
  func.func @_conv1_stats_kernel(%arg0: i32, %arg1: memref<32x8xf32, #tpu.memory_space<vmem>>, %arg2: memref<3x8x128xf32, #tpu.memory_space<vmem>>, %arg3: memref<32x8xf32, #tpu.memory_space<vmem>>, %arg4: memref<1x1x128xf32, #tpu.memory_space<vmem>>, %arg5: memref<1x1x128xf32, #tpu.memory_space<vmem>>) attributes {dimension_semantics = [#tpu.dimension_semantics<parallel>], iteration_bounds = array<i64: 2>, scalar_prefetch = 0 : i64, scratch_operands = 0 : i64, tpu.core_type = #tpu.core_type<tc>, window_params = [{transform_indices = @transform_0, window_bounds = array<i64: 32, 8>}, {pipeline_mode = #tpu.pipeline_mode<synchronous>, transform_indices = @transform_1, window_bounds = array<i64: 3, 8, 128>}, {transform_indices = @transform_2, window_bounds = array<i64: 32, 8>}, {transform_indices = @transform_3, window_bounds = array<i64: 1, 1, 128>}, {transform_indices = @transform_4, window_bounds = array<i64: 1, 1, 128>}]} {
    %c0 = arith.constant 0 : index
    %c0_0 = arith.constant 0 : index
    %0 = vector.load %arg1[%c0, %c0_0] : memref<32x8xf32, #tpu.memory_space<vmem>>, vector<32x8xf32>
    %c0_1 = arith.constant 0 : index
    %c0_2 = arith.constant 0 : index
    %c0_3 = arith.constant 0 : index
    %1 = vector.load %arg2[%c0_1, %c0_2, %c0_3] : memref<3x8x128xf32, #tpu.memory_space<vmem>>, vector<1x8x128xf32>
    %2 = vector.shape_cast %1 : vector<1x8x128xf32> to vector<8x128xf32>
    %cst = arith.constant dense<0.000000e+00> : vector<32x128xf32>
    %3 = tpu.matmul %0, %2, %cst {dimension_numbers = #tpu.dot_dimension_numbers<[1], [0], [0], [1], [0, 0, 1, 1], [], []>} : vector<32x8xf32>, vector<8x128xf32>, vector<32x128xf32> -> vector<32x128xf32>
    %c1 = arith.constant 1 : index
    %c0_4 = arith.constant 0 : index
    %c0_5 = arith.constant 0 : index
    %4 = vector.load %arg2[%c1, %c0_4, %c0_5] : memref<3x8x128xf32, #tpu.memory_space<vmem>>, vector<1x8x128xf32>
    %5 = vector.shape_cast %4 : vector<1x8x128xf32> to vector<8x128xf32>
    %cst_6 = arith.constant dense<0.000000e+00> : vector<32x128xf32>
    %6 = tpu.matmul %0, %5, %cst_6 {dimension_numbers = #tpu.dot_dimension_numbers<[1], [0], [0], [1], [0, 0, 1, 1], [], []>} : vector<32x8xf32>, vector<8x128xf32>, vector<32x128xf32> -> vector<32x128xf32>
    %c2 = arith.constant 2 : index
    %c0_7 = arith.constant 0 : index
    %c0_8 = arith.constant 0 : index
    %7 = vector.load %arg2[%c2, %c0_7, %c0_8] : memref<3x8x128xf32, #tpu.memory_space<vmem>>, vector<1x8x128xf32>
    %8 = vector.shape_cast %7 : vector<1x8x128xf32> to vector<8x128xf32>
    %cst_9 = arith.constant dense<0.000000e+00> : vector<32x128xf32>
    %9 = tpu.matmul %0, %8, %cst_9 {dimension_numbers = #tpu.dot_dimension_numbers<[1], [0], [0], [1], [0, 0, 1, 1], [], []>} : vector<32x8xf32>, vector<8x128xf32>, vector<32x128xf32> -> vector<32x128xf32>
    %10 = tpu.iota {dimensions = array<i32: 0>} : vector<32x1xi32>
    %c16_i32 = arith.constant 16 : i32
    %c0_i32 = arith.constant 0 : i32
    %11 = arith.cmpi eq, %c16_i32, %c0_i32 : i32
    %c1_i32 = arith.constant 1 : i32
    %12 = arith.select %11, %c1_i32, %c16_i32 : i32
    %13 = vector.broadcast %12 : i32 to vector<32x1xi32>
    %14 = arith.remsi %10, %13 : vector<32x1xi32>
    %c0_i32_10 = arith.constant 0 : i32
    %15 = vector.broadcast %c0_i32_10 : i32 to vector<32x1xi32>
    %16 = arith.cmpi ne, %14, %15 : vector<32x1xi32>
    %c0_i32_11 = arith.constant 0 : i32
    %17 = vector.broadcast %c0_i32_11 : i32 to vector<32x1xi32>
    %18 = arith.cmpi slt, %14, %17 : vector<32x1xi32>
    %c0_i32_12 = arith.constant 0 : i32
    %19 = arith.cmpi slt, %12, %c0_i32_12 : i32
    %20 = vector.broadcast %19 : i1 to vector<32x1xi1>
    %21 = vector.broadcast %20 : vector<32x1xi1> to vector<32x1xi1>
    %22 = arith.xori %18, %21 : vector<32x1xi1>
    %23 = arith.andi %22, %16 : vector<32x1xi1>
    %24 = vector.broadcast %12 : i32 to vector<32x1xi32>
    %25 = arith.addi %14, %24 : vector<32x1xi32>
    %26 = arith.select %23, %25, %14 : vector<32x1xi1>, vector<32x1xi32>
    %c1_i32_13 = arith.constant 1 : i32
    %27 = vector.broadcast %c1_i32_13 : i32 to vector<32x1xi32>
    %28 = arith.cmpi sge, %26, %27 : vector<32x1xi32>
    %c1_i32_14 = arith.constant 1 : i32
    %29 = tpu.dynamic_rotate %3 by %c1_i32_14 dim 0 : vector<32x128xf32>, i32 -> vector<32x128xf32>
    %cst_15 = arith.constant 0.000000e+00 : f32
    %30 = vector.shape_cast %28 : vector<32x1xi1> to vector<32x1xi1>
    %31 = vector.broadcast %30 : vector<32x1xi1> to vector<32x128xi1>
    %32 = vector.broadcast %cst_15 : f32 to vector<32x128xf32>
    %33 = arith.select %31, %29, %32 : vector<32x128xi1>, vector<32x128xf32>
    %34 = arith.addf %6, %33 : vector<32x128xf32>
    %c14_i32 = arith.constant 14 : i32
    %35 = vector.broadcast %c14_i32 : i32 to vector<32x1xi32>
    %36 = arith.cmpi sle, %26, %35 : vector<32x1xi32>
    %c31_i32 = arith.constant 31 : i32
    %37 = tpu.dynamic_rotate %9 by %c31_i32 dim 0 : vector<32x128xf32>, i32 -> vector<32x128xf32>
    %cst_16 = arith.constant 0.000000e+00 : f32
    %38 = vector.shape_cast %36 : vector<32x1xi1> to vector<32x1xi1>
    %39 = vector.broadcast %38 : vector<32x1xi1> to vector<32x128xi1>
    %40 = vector.broadcast %cst_16 : f32 to vector<32x128xf32>
    %41 = arith.select %39, %37, %40 : vector<32x128xi1>, vector<32x128xf32>
    %42 = arith.addf %34, %41 : vector<32x128xf32>
    %43 = vector.extract_strided_slice %42 {offsets = [0, 0], sizes = [32, 8], strides = [1, 1]} : vector<32x128xf32> to vector<32x8xf32>
    %c0_17 = arith.constant 0 : index
    %c0_18 = arith.constant 0 : index
    %44 = vector.load %arg3[%c0_17, %c0_18] : memref<32x8xf32, #tpu.memory_space<vmem>>, vector<32x8xf32>
    tpu.vector_store %arg3[%c0_17, %c0_18], %43 {strides = array<i32>} : memref<32x8xf32, #tpu.memory_space<vmem>>, vector<32x8xf32>,
    %cst_19 = arith.constant dense<0.000000e+00> : vector<128xf32>
    %45 = vector.multi_reduction <add>, %42, %cst_19 [0] : vector<32x128xf32> to vector<128xf32>
    %46 = vector.shape_cast %45 : vector<128xf32> to vector<1x128xf32>
    %47 = vector.shape_cast %46 : vector<1x128xf32> to vector<1x1x128xf32>
    %c0_20 = arith.constant 0 : index
    %c0_21 = arith.constant 0 : index
    %c0_22 = arith.constant 0 : index
    %48 = vector.load %arg4[%c0_20, %c0_21, %c0_22] : memref<1x1x128xf32, #tpu.memory_space<vmem>>, vector<1x1x128xf32>
    tpu.vector_store %arg4[%c0_20, %c0_21, %c0_22], %47 {strides = array<i32>} : memref<1x1x128xf32, #tpu.memory_space<vmem>>, vector<1x1x128xf32>,
    %49 = arith.mulf %42, %42 : vector<32x128xf32>
    %cst_23 = arith.constant dense<0.000000e+00> : vector<128xf32>
    %50 = vector.multi_reduction <add>, %49, %cst_23 [0] : vector<32x128xf32> to vector<128xf32>
    %51 = vector.shape_cast %50 : vector<128xf32> to vector<1x128xf32>
    %52 = vector.shape_cast %51 : vector<1x128xf32> to vector<1x1x128xf32>
    %c0_24 = arith.constant 0 : index
    %c0_25 = arith.constant 0 : index
    %c0_26 = arith.constant 0 : index
    %53 = vector.load %arg5[%c0_24, %c0_25, %c0_26] : memref<1x1x128xf32, #tpu.memory_space<vmem>>, vector<1x1x128xf32>
    tpu.vector_store %arg5[%c0_24, %c0_25, %c0_26], %52 {strides = array<i32>} : memref<1x1x128xf32, #tpu.memory_space<vmem>>, vector<1x1x128xf32>,
    return
  }
  func.func @transform_0(%arg0: i32) -> (i32, i32) {
    %c0_i32 = arith.constant 0 : i32
    %c0_i32_0 = arith.constant 0 : i32
    return %arg0, %c0_i32 : i32, i32
  }
  func.func @transform_1(%arg0: i32) -> (i32, i32, i32) {
    %c0_i32 = arith.constant 0 : i32
    %c0_i32_0 = arith.constant 0 : i32
    %c0_i32_1 = arith.constant 0 : i32
    %c0_i32_2 = arith.constant 0 : i32
    return %c0_i32, %c0_i32_0, %c0_i32_1 : i32, i32, i32
  }
  func.func @transform_2(%arg0: i32) -> (i32, i32) {
    %c0_i32 = arith.constant 0 : i32
    %c0_i32_0 = arith.constant 0 : i32
    return %arg0, %c0_i32 : i32, i32
  }
  func.func @transform_3(%arg0: i32) -> (i32, i32, i32) {
    %c0_i32 = arith.constant 0 : i32
    %c0_i32_0 = arith.constant 0 : i32
    %c0_i32_1 = arith.constant 0 : i32
    return %arg0, %c0_i32, %c0_i32_0 : i32, i32, i32
  }
  func.func @transform_4(%arg0: i32) -> (i32, i32, i32) {
    %c0_i32 = arith.constant 0 : i32
    %c0_i32_0 = arith.constant 0 : i32
    %c0_i32_1 = arith.constant 0 : i32
    return %arg0, %c0_i32, %c0_i32_0 : i32, i32, i32
  }
}

</mosaic_0001>

<llo_original>
// kernel: tpu_custom_call.1
$region0: #{tpu_custom_call.1}
  #allocation0 [shape = 'u32[]', space=smem, size = 0x4, offset = 0x4, fixed_abs, tag = 'smem constant byte address 0x4 - core index']
  #allocation1 [shape = 'u32[72,128]{1,0:T(1,128)}', space=vmem, size = 0x9000, scoped, tag = 'internal scratch']
  %s0 = inlined_call_operand.vmem [shape: f32[64,8], index: 0, kind: input, shape index: {}]
  %s1 = inlined_call_operand.vmem [shape: f32[3,8,128], index: 1, kind: input, shape index: {}]
  %s2 = inlined_call_operand.vmem [shape: f32[64,8], index: 2, kind: output, shape index: {0}]
  %s3 = inlined_call_operand.hbm [shape: f32[2,1,128], index: 3, kind: output, shape index: {1}]
  %s4 = inlined_call_operand.hbm [shape: f32[2,1,128], index: 4, kind: output, shape index: {2}]
  %5 = xla_tuple %s2, %s3, %s4
  %s6 = sld [smem:[#allocation0]]
  $region57: #{tpu_custom_call.1} parent=0
    _
  %s8 = ssub.s32 1, %s6
  %s9 = scalar_select 0, %s8, %s6
  $region1: #{tpu_custom_call.1} parent=0
    #allocation2 [shape = 'u8[1024]{0}', space=vmem, size = 0x400, scoped, tag = 'output window, operand 1']
    #allocation3 [shape = 's32[2]{0}', space=sflag, size = 0x8, scoped, tag = 'scoped memory for tpu_custom_call.1']
    #allocation4 [shape = 'u8[1024]{0}', space=vmem, size = 0x400, scoped, tag = 'output window, operand 2']
    #allocation5 [shape = 's32[2]{0}', space=sflag, size = 0x8, scoped, tag = 'scoped memory for tpu_custom_call.1']
    %10 = vsyncpa [#allocation3], 0
    %s11 = scalar_lea.sflag [#allocation3], 1
    %12 = vsyncpa %s11, 0
    %13 = vsyncpa [#allocation5], 0
    %s14 = scalar_lea.sflag [#allocation5], 1
    %15 = vsyncpa %s14, 0
    loop: start=0, step=1, limit=4
    $region2: #{tpu_custom_call.1} parent=1 // loop_pre_header
      _
    $region3: #{tpu_custom_call.1} parent=1 // loop_header
      %s17 = sphi 0, %s21
      %p18 = scmp.ge.s32.totalorder %s17, 4
      %s27 = sphi 0, %s29
      %s30 = sphi 0, %s27
      %s31 = sphi 0, %s30
      %s47 = sphi 0, %s31
      %s51 = sphi 0, %s51
      %s53 = sphi 0, %s51
      %s54 = sphi 0, %s53
      %s68 = sphi 0, %s54
      %s74 = sphi 0, %s76
      %s77 = sphi 0, %s74
      %s78 = sphi 0, %s77
      %s94 = sphi 0, %s78
      %s100 = sphi 0, %s102
      %s103 = sphi 0, %s100
      %s104 = sphi 0, %s103
      %s120 = sphi 0, %s104
      %s126 = sphi 0, %s128
      %s129 = sphi 0, %s126
      %s130 = sphi 0, %s129
      %s146 = sphi 0, %s130
    $region4: #{tpu_custom_call.1} parent=1 // loop_header_branch
      %20 = sbr.rel (%p18) target = $region8
    $region5: #{tpu_custom_call.1} parent=1 // loop_body
      %s22 = ssub.s32 %s17, 1
      %s23 = ssub.s32 %s17, 2
      %s24 = sadd.s32 %s17, 1
      %s25 = ssub.s32 %s17, %s24
      %p26 = scmp.eq.s32.totalorder %s25, 0
      %s28 = sadd.s32 %s27, 1
      %s29 = scalar_select %p26, %s27, %s28
      %p32 = pneg %p26
      %p33 = scmp.eq.s32.totalorder %s17, 1
      %p34 = por %p32, %p33
      %p35 = scmp.ne.s32.totalorder %s27, %s30
      %p36 = scmp.eq.s32.totalorder %s17, 0
      %p37 = por %p35, %p36
      %p38 = scmp.ne.s32.totalorder %s27, %s30
      %p39 = scmp.eq.s32.totalorder %s22, 1
      %p40 = por %p38, %p39
      %p41 = scmp.ne.s32.totalorder %s30, %s31
      %p42 = scmp.eq.s32.totalorder %s22, 0
      %p43 = por %p41, %p42
      %p44 = scmp.ne.s32.totalorder %s30, %s31
      %p45 = scmp.eq.s32.totalorder %s23, 1
      %p46 = por %p44, %p45
      %p48 = scmp.ne.s32.totalorder %s31, %s47
      %p49 = scmp.eq.s32.totalorder %s23, 0
      %p50 = por %p48, %p49
      %s52 = sadd.s32 %s51, 1
      %p55 = scmp.eq.s32.totalorder %s17, 1
      %p56 = scmp.ne.s32.totalorder %s51, %s53
      %p57 = scmp.eq.s32.totalorder %s17, 0
      %p58 = por %p56, %p57
      %p59 = scmp.ne.s32.totalorder %s51, %s53
      %p60 = scmp.eq.s32.totalorder %s22, 1
      %p61 = por %p59, %p60
      %p62 = scmp.ne.s32.totalorder %s53, %s54
      %p63 = scmp.eq.s32.totalorder %s22, 0
      %p64 = por %p62, %p63
      %p65 = scmp.ne.s32.totalorder %s53, %s54
      %p66 = scmp.eq.s32.totalorder %s23, 1
      %p67 = por %p65, %p66
      %p69 = scmp.ne.s32.totalorder %s54, %s68
      %p70 = scmp.eq.s32.totalorder %s23, 0
      %p71 = por %p69, %p70
      %s72 = ssub.s32 %s17, %s24
      %p73 = scmp.eq.s32.totalorder %s72, 0
      %s75 = sadd.s32 %s74, 1
      %s76 = scalar_select %p73, %s74, %s75
      %p79 = pneg %p73
      %p80 = scmp.eq.s32.totalorder %s17, 1
      %p81 = por %p79, %p80
      %p82 = scmp.ne.s32.totalorder %s74, %s77
      %p83 = scmp.eq.s32.totalorder %s17, 0
      %p84 = por %p82, %p83
      %p85 = scmp.ne.s32.totalorder %s74, %s77
      %p86 = scmp.eq.s32.totalorder %s22, 1
      %p87 = por %p85, %p86
      %p88 = scmp.ne.s32.totalorder %s77, %s78
      %p89 = scmp.eq.s32.totalorder %s22, 0
      %p90 = por %p88, %p89
      %p91 = scmp.ne.s32.totalorder %s77, %s78
      %p92 = scmp.eq.s32.totalorder %s23, 1
      %p93 = por %p91, %p92
      %p95 = scmp.ne.s32.totalorder %s78, %s94
      %p96 = scmp.eq.s32.totalorder %s23, 0
      %p97 = por %p95, %p96
      %s98 = ssub.s32 %s17, %s24
      %p99 = scmp.eq.s32.totalorder %s98, 0
      %s101 = sadd.s32 %s100, 1
      %s102 = scalar_select %p99, %s100, %s101
      %p105 = pneg %p99
      %p106 = scmp.eq.s32.totalorder %s17, 1
      %p107 = por %p105, %p106
      %p108 = scmp.ne.s32.totalorder %s100, %s103
      %p109 = scmp.eq.s32.totalorder %s17, 0
      %p110 = por %p108, %p109
      %p111 = scmp.ne.s32.totalorder %s100, %s103
      %p112 = scmp.eq.s32.totalorder %s22, 1
      %p113 = por %p111, %p112
      %p114 = scmp.ne.s32.totalorder %s103, %s104
      %p115 = scmp.eq.s32.totalorder %s22, 0
      %p116 = por %p114, %p115
      %p117 = scmp.ne.s32.totalorder %s103, %s104
      %p118 = scmp.eq.s32.totalorder %s23, 1
      %p119 = por %p117, %p118
      %p121 = scmp.ne.s32.totalorder %s104, %s120
      %p122 = scmp.eq.s32.totalorder %s23, 0
      %p123 = por %p121, %p122
      %s124 = ssub.s32 %s17, %s24
      %p125 = scmp.eq.s32.totalorder %s124, 0
      %s127 = sadd.s32 %s126, 1
      %s128 = scalar_select %p125, %s126, %s127
      %p131 = pneg %p125
      %p132 = scmp.eq.s32.totalorder %s17, 1
      %p133 = por %p131, %p132
      %p134 = scmp.ne.s32.totalorder %s126, %s129
      %p135 = scmp.eq.s32.totalorder %s17, 0
      %p136 = por %p134, %p135
      %p137 = scmp.ne.s32.totalorder %s126, %s129
      %p138 = scmp.eq.s32.totalorder %s22, 1
      %p139 = por %p137, %p138
      %p140 = scmp.ne.s32.totalorder %s129, %s130
      %p141 = scmp.eq.s32.totalorder %s22, 0
      %p142 = por %p140, %p141
      %p143 = scmp.ne.s32.totalorder %s129, %s130
      %p144 = scmp.eq.s32.totalorder %s23, 1
      %p145 = por %p143, %p144
      %p147 = scmp.ne.s32.totalorder %s130, %s146
      %p148 = scmp.eq.s32.totalorder %s23, 0
      %p149 = por %p147, %p148
      %p150 = scmp.le.s32.totalorder 1, %s17
      %p151 = scmp.lt.s32.totalorder %s17, 3
      %p152 = pnand %p150, %p151
      %p153 = pneg %p152
      // Predicated region
      $region9: #{tpu_custom_call.1} parent=5 // pred_check
        _
      $region10: #{tpu_custom_call.1} parent=5 // pred_check_branch
        %155 = sbr.rel (%p152) target = $region12
      $region11: #{tpu_custom_call.1} parent=5 // pred_region
        %s156 = ssub.s32 %s17, 1
        // Predicated region
        $region13: #{tpu_custom_call.1} parent=11 // pred_check
          %p157 = pneg %p64
        $region14: #{tpu_custom_call.1} parent=11 // pred_check_branch
          %159 = sbr.rel (%p157) target = $region16
        $region15: #{tpu_custom_call.1} parent=11 // pred_region
          _
        $region16: #{tpu_custom_call.1} parent=11 // pred_fallthru
          _
      $region12: #{tpu_custom_call.1} parent=5 // pred_fallthru
        _
      %p160 = scmp.lt.s32.totalorder %s17, 2
      // Predicated region
      $region17: #{tpu_custom_call.1} parent=5 // pred_check
        %p161 = pneg %p160
      $region18: #{tpu_custom_call.1} parent=5 // pred_check_branch
        %163 = sbr.rel (%p161) target = $region20
      $region19: #{tpu_custom_call.1} parent=5 // pred_region
        // Predicated region
        $region21: #{tpu_custom_call.1} parent=19 // pred_check
          %p164 = pneg %p37
        $region22: #{tpu_custom_call.1} parent=19 // pred_check_branch
          %166 = sbr.rel (%p164) target = $region24
        $region23: #{tpu_custom_call.1} parent=19 // pred_region
          %s167 = smul.u32 4, %s17
          %p168 = scmp.lt.s32.totalorder %s167, 7
          %s169 = scalar_select %p168, %s167, 7
          %s170 = smul.addr %s169, 8
          %s171 = scalar_lea.vmem %s0, %s170
          %s172 = smul.u32 4, %s17
        $region24: #{tpu_custom_call.1} parent=19 // pred_fallthru
          _
      $region20: #{tpu_custom_call.1} parent=5 // pred_fallthru
        _
      %p173 = scmp.le.s32.totalorder 1, %s17
      %p174 = scmp.lt.s32.totalorder %s17, 3
      %p175 = pnand %p173, %p174
      %p176 = pneg %p175
      // Predicated region
      $region25: #{tpu_custom_call.1} parent=5 // pred_check
        _
      $region26: #{tpu_custom_call.1} parent=5 // pred_check_branch
        %178 = sbr.rel (%p175) target = $region28
      $region27: #{tpu_custom_call.1} parent=5 // pred_region
        %s179 = ssub.s32 %s17, 1
        %s180 = smul.u32 4, %s22
        %p181 = scmp.lt.s32.totalorder %s180, 7
        %s182 = scalar_select %p181, %s180, 7
        %s183 = smul.addr %s182, 8
        %s184 = scalar_lea.vmem %s0, %s183
        %p185 = pneg %p43
        %p186 = pneg %p40
        %p187 = pneg %p64
        %p188 = pneg %p61
        %p189 = pneg %p90
        %p190 = pneg %p87
        %s191 = smul.u32 4, %s22
        %p192 = scmp.lt.s32.totalorder %s191, 7
        %s193 = scalar_select %p192, %s191, 7
        %s194 = smul.addr %s193, 8
        %s195 = scalar_lea.vmem %s2, %s194
        %p196 = pneg %p116
        %p197 = pneg %p113
        %s198 = sand.u32 %s103, 1
        %s199 = scalar_lea.sflag [#allocation3], %s198
        %s200 = sand.u32 %s103, 1
        %s201 = scalar_lea.vmem [#allocation2], %s200
        %p202 = pneg %p142
        %p203 = pneg %p139
        %s204 = sand.u32 %s129, 1
        %s205 = scalar_lea.sflag [#allocation5], %s204
        %s206 = sand.u32 %s129, 1
        %s207 = scalar_lea.vmem [#allocation4], %s206
        %s208 = smul.u32 4, %s22
        %p209 = scmp.lt.s32.totalorder %s208, 7
        %s210 = scalar_select %p209, %s208, 7
        %s211 = smul.addr %s210, 8
        %s212 = scalar_lea.vmem %s0, %s211
        %s213 = smul.u32 4, %s22
        %s214 = smul.u32 4, %s22
        %p215 = scmp.lt.s32.totalorder %s214, 7
        %s216 = scalar_select %p215, %s214, 7
        %s217 = smul.addr %s216, 8
        %s218 = scalar_lea.vmem %s2, %s217
        %s219 = smul.u32 4, %s22
        %v220 = vld [vmem:[%s212] sm:$0xff]
        %v221 = vld [vmem:[%s212 + $0x8] sm:$0xff]
        %v222 = vld [vmem:[%s212 + $0x10] sm:$0xff]
        %v223 = vld [vmem:[%s212 + $0x18] sm:$0xff]
        %v224 = vld [vmem:[%s1] sm:$0xff]
        %vm225 = vcmask 64512
        %v227 = vsel %vm225, %v220, 0
        %v230 = vsel %vm225, %v221, 0
        %v233 = vsel %vm225, %v222, 0
        %v236 = vsel %vm225, %v223, 0
        %238 = vmatpush.msra.mxu0 0.0
        %239 = vmatpush.msra.mxu0 0.0
        %240 = vmatpush.msra.mxu0 0.0
        %241 = vmatpush.msra.mxu0 0.0
        %242 = vmatpush.msra.mxu0 0.0
        %243 = vmatpush.msra.mxu0 0.0
        %244 = vmatpush.msra.mxu0 0.0
        %245 = vmatpush.msra.mxu0 0.0
        %246 = vmatpush.msra.mxu0 0.0
        %247 = vmatpush.msra.mxu0 0.0
        %248 = vmatpush.msra.mxu0 0.0
        %249 = vmatpush.msra.mxu0 0.0
        %250 = vmatpush.msra.mxu0 0.0
        %251 = vmatpush.msra.mxu0 0.0
        %252 = vmatpush.msra.mxu0 0.0
        %253 = vmatpush.msra.mxu0 %v224
        %254 = vmatmul.f32.gmra.mxu0 %v227
        %v255 = vpop.f32.mrf.mxu0
        %v256 = vadd.f32 0.0, %v255
        %257 = vmatmul.f32.gmra.mxu0 %v230
        %v258 = vpop.f32.mrf.mxu0
        %v259 = vadd.f32 0.0, %v258
        %260 = vmatmul.f32.gmra.mxu0 %v233
        %v261 = vpop.f32.mrf.mxu0
        %v262 = vadd.f32 0.0, %v261
        %263 = vmatmul.f32.gmra.mxu0 %v236
        %v264 = vpop.f32.mrf.mxu0
        %v265 = vadd.f32 0.0, %v264
        %266 = vdwg.mxu0
        %s267 = scalar_lea.vmem %s1, 8
        %v268 = vld [vmem:[%s267] sm:$0xff]
        %s269 = scalar_lea.vmem %s1, 16
        %v270 = vld [vmem:[%s269] sm:$0xff]
        %271 = vmatpush.msra.mxu0 0.0
        %272 = vmatpush.msra.mxu0 0.0
        %273 = vmatpush.msra.mxu0 0.0
        %274 = vmatpush.msra.mxu0 0.0
        %275 = vmatpush.msra.mxu0 0.0
        %276 = vmatpush.msra.mxu0 0.0
        %277 = vmatpush.msra.mxu0 0.0
        %278 = vmatpush.msra.mxu0 0.0
        %279 = vmatpush.msra.mxu0 0.0
        %280 = vmatpush.msra.mxu0 0.0
        %281 = vmatpush.msra.mxu0 0.0
        %282 = vmatpush.msra.mxu0 0.0
        %283 = vmatpush.msra.mxu0 0.0
        %284 = vmatpush.msra.mxu0 0.0
        %285 = vmatpush.msra.mxu0 0.0
        %286 = vmatpush.msra.mxu0 %v270
        %287 = vmatmul.f32.gmra.mxu0 %v227
        %v288 = vpop.f32.mrf.mxu0
        %v289 = vadd.f32 0.0, %v288
        %290 = vmatmul.f32.gmra.mxu0 %v230
        %v291 = vpop.f32.mrf.mxu0
        %v292 = vadd.f32 0.0, %v291
        %293 = vmatmul.f32.gmra.mxu0 %v233
        %v294 = vpop.f32.mrf.mxu0
        %v295 = vadd.f32 0.0, %v294
        %296 = vmatmul.f32.gmra.mxu0 %v236
        %v297 = vpop.f32.mrf.mxu0
        %v298 = vadd.f32 0.0, %v297
        %299 = vdwg.mxu0
        %v300 = vlaneseq
        %v301 = vshrl.u32 %v300, 7
        %v302 = vadd.s32 %v301, 8
        %v303 = vadd.s32 %v301, 16
        %v304 = vadd.s32 %v301, 24
        %vm305 = vcmp.lt.s32.totalorder %v301, 0
        %v306 = vsub.s32 0, %v301
        %v307 = vsel %vm305, %v306, %v301
        %v308 = vshrl.u32 %v307, 4
        %v309 = vand.u32 %v307, 15
        %v310 = vsub.s32 0, %v309
        %v311 = vsel %vm305, %v310, %v309
        %vm312 = vcmp.lt.s32.totalorder %v302, 0
        %v313 = vsub.s32 0, %v302
        %v314 = vsel %vm312, %v313, %v302
        %v315 = vshrl.u32 %v314, 4
        %v316 = vand.u32 %v314, 15
        %v317 = vsub.s32 0, %v316
        %v318 = vsel %vm312, %v317, %v316
        %vm319 = vcmp.lt.s32.totalorder %v303, 0
        %v320 = vsub.s32 0, %v303
        %v321 = vsel %vm319, %v320, %v303
        %v322 = vshrl.u32 %v321, 4
        %v323 = vand.u32 %v321, 15
        %v324 = vsub.s32 0, %v323
        %v325 = vsel %vm319, %v324, %v323
        %vm326 = vcmp.lt.s32.totalorder %v304, 0
        %v327 = vsub.s32 0, %v304
        %v328 = vsel %vm326, %v327, %v304
        %v329 = vshrl.u32 %v328, 4
        %v330 = vand.u32 %v328, 15
        %v331 = vsub.s32 0, %v330
        %v332 = vsel %vm326, %v331, %v330
        %vm333 = vcmp.ne.s32.totalorder %v311, 0
        %vm334 = vcmp.ne.s32.totalorder %v318, 0
        %vm335 = vcmp.ne.s32.totalorder %v325, 0
        %vm336 = vcmp.ne.s32.totalorder %v332, 0
        %vm337 = vcmp.lt.s32.totalorder %v311, 0
        %vm338 = vcmp.lt.s32.totalorder %v318, 0
        %vm339 = vcmp.lt.s32.totalorder %v325, 0
        %vm340 = vcmp.lt.s32.totalorder %v332, 0
        %vm341 = vmand %vm337, %vm333
        %vm342 = vmand %vm338, %vm334
        %vm343 = vmand %vm339, %vm335
        %vm344 = vmand %vm340, %vm336
        %v345 = vadd.s32 %v311, 16
        %v346 = vadd.s32 %v318, 16
        %v347 = vadd.s32 %v325, 16
        %v348 = vadd.s32 %v332, 16
        %v349 = vsel %vm341, %v345, %v311
        %v350 = vsel %vm342, %v346, %v318
        %v351 = vsel %vm343, %v347, %v325
        %v352 = vsel %vm344, %v348, %v332
        %vm353 = vcmp.ge.s32.totalorder %v349, 1
        %vm354 = vcmp.ge.s32.totalorder %v350, 1
        %vm355 = vcmp.ge.s32.totalorder %v351, 1
        %vm356 = vcmp.ge.s32.totalorder %v352, 1
        %v357 = vrot.slane %v256, 7
        %v358 = vrot.slane %v259, 7
        %v359 = vrot.slane %v262, 7
        %v360 = vrot.slane %v265, 7
        %vm361 = vcmp.lt.s32.totalorder %v301, 1
        %v362 = vsel %vm361, %v359, %v360
        %v363 = vsel %vm361, %v358, %v359
        %v364 = vsel %vm361, %v357, %v358
        %v365 = vsel %vm361, %v360, %v357
        %v366 = vsel %vm353, 1, 0
        %v367 = vsel %vm354, 1, 0
        %v368 = vsel %vm355, 1, 0
        %v369 = vsel %vm356, 1, 0
        %vm370 = vcmp.eq.s32.totalorder %v366, 1
        %vm371 = vcmp.eq.s32.totalorder %v367, 1
        %vm372 = vcmp.eq.s32.totalorder %v368, 1
        %vm373 = vcmp.eq.s32.totalorder %v369, 1
        %v374 = vsel %vm370, %v365, 0.0
        %v375 = vsel %vm371, %v364, 0.0
        %v376 = vsel %vm372, %v363, 0.0
        %v377 = vsel %vm373, %v362, 0.0
        %378 = vmatpush.msra.mxu0 0.0
        %379 = vmatpush.msra.mxu0 0.0
        %380 = vmatpush.msra.mxu0 0.0
        %381 = vmatpush.msra.mxu0 0.0
        %382 = vmatpush.msra.mxu0 0.0
        %383 = vmatpush.msra.mxu0 0.0
        %384 = vmatpush.msra.mxu0 0.0
        %385 = vmatpush.msra.mxu0 0.0
        %386 = vmatpush.msra.mxu0 0.0
        %387 = vmatpush.msra.mxu0 0.0
        %388 = vmatpush.msra.mxu0 0.0
        %389 = vmatpush.msra.mxu0 0.0
        %390 = vmatpush.msra.mxu0 0.0
        %391 = vmatpush.msra.mxu0 0.0
        %392 = vmatpush.msra.mxu0 0.0
        %393 = vmatpush.msra.mxu0 %v268
        %394 = vmatmul.f32.gmra.mxu0 %v227
        %v395 = vpop.f32.mrf.mxu0
        %v396 = vadd.f32 %v374, %v395
        %397 = vmatmul.f32.gmra.mxu0 %v230
        %v398 = vpop.f32.mrf.mxu0
        %v399 = vadd.f32 %v375, %v398
        %400 = vmatmul.f32.gmra.mxu0 %v233
        %v401 = vpop.f32.mrf.mxu0
        %v402 = vadd.f32 %v376, %v401
        %403 = vmatmul.f32.gmra.mxu0 %v236
        %v404 = vpop.f32.mrf.mxu0
        %v405 = vadd.f32 %v377, %v404
        %406 = vdwg.mxu0
        %vm407 = vcmp.le.s32.totalorder %v349, 14
        %vm408 = vcmp.le.s32.totalorder %v350, 14
        %vm409 = vcmp.le.s32.totalorder %v351, 14
        %vm410 = vcmp.le.s32.totalorder %v352, 14
        %v411 = vrot.slane %v289, 1
        %v412 = vrot.slane %v292, 1
        %v413 = vrot.slane %v295, 1
        %v414 = vrot.slane %v298, 1
        %vm415 = vcmp.lt.s32.totalorder %v301, 7
        %v416 = vsel %vm415, %v413, %v414
        %v417 = vsel %vm415, %v412, %v413
        %v418 = vsel %vm415, %v411, %v412
        %v419 = vsel %vm415, %v414, %v411
        %v420 = vsel %vm407, 1, 0
        %v421 = vsel %vm408, 1, 0
        %v422 = vsel %vm409, 1, 0
        %v423 = vsel %vm410, 1, 0
        %vm424 = vcmp.eq.s32.totalorder %v420, 1
        %vm425 = vcmp.eq.s32.totalorder %v421, 1
        %vm426 = vcmp.eq.s32.totalorder %v422, 1
        %vm427 = vcmp.eq.s32.totalorder %v423, 1
        %v428 = vsel %vm424, %v418, 0.0
        %v429 = vsel %vm425, %v417, 0.0
        %v430 = vsel %vm426, %v416, 0.0
        %v431 = vsel %vm427, %v419, 0.0
        %v432 = vadd.f32 %v396, %v428
        %v433 = vadd.f32 %v399, %v429
        %v434 = vadd.f32 %v402, %v430
        %v435 = vadd.f32 %v405, %v431
        %436 = vst.msk [vmem:[%s218] sm:$0xff] %vm225, %v432
        %437 = vst.msk [vmem:[%s218 + $0x8] sm:$0xff] %vm225, %v433
        %438 = vst.msk [vmem:[%s218 + $0x10] sm:$0xff] %vm225, %v434
        %439 = vst.msk [vmem:[%s218 + $0x18] sm:$0xff] %vm225, %v435
        %v440 = vadd.f32 %v432, %v433
        %v441 = vadd.f32 %v440, %v434
        %v442 = vadd.f32 %v441, %v435
        %v443 = vrot.slane %v442, 4
        %v444 = vadd.f32 %v442, %v443
        %v445 = vrot.slane %v444, 2
        %v446 = vadd.f32 %v444, %v445
        %v447 = vrot.slane %v446, 1
        %v448 = vadd.f32 %v446, %v447
        %449 = vst [vmem:[%s201] sm:$0x1] %v448
        %v450 = vmul.f32 %v432, %v432
        %v451 = vmul.f32 %v433, %v433
        %v452 = vmul.f32 %v434, %v434
        %v453 = vmul.f32 %v435, %v435
        %v454 = vadd.f32 %v450, %v451
        %v455 = vadd.f32 %v454, %v452
        %v456 = vadd.f32 %v455, %v453
        %v457 = vrot.slane %v456, 4
        %v458 = vadd.f32 %v456, %v457
        %v459 = vrot.slane %v458, 2
        %v460 = vadd.f32 %v458, %v459
        %v461 = vrot.slane %v460, 1
        %v462 = vadd.f32 %v460, %v461
        %463 = vst [vmem:[%s207] sm:$0x1] %v462
        %s464 = smul.u32 4, %s22
        %p465 = scmp.lt.s32.totalorder %s464, 7
        %s466 = scalar_select %p465, %s464, 7
        %s467 = smul.addr %s466, 8
        %s468 = scalar_lea.vmem %s2, %s467
        %s469 = sand.u32 %s103, 1
        %s470 = scalar_lea.sflag [#allocation3], %s469
        %s471 = sand.u32 %s103, 1
        %s472 = scalar_lea.vmem [#allocation2], %s471
        %s473 = sand.u32 %s129, 1
        %s474 = scalar_lea.sflag [#allocation5], %s473
        %s475 = sand.u32 %s129, 1
        %s476 = scalar_lea.vmem [#allocation4], %s475
        // Predicated region
        $region29: #{tpu_custom_call.1} parent=27 // pred_check
          %p477 = pneg %p87
        $region30: #{tpu_custom_call.1} parent=27 // pred_check_branch
          %479 = sbr.rel (%p477) target = $region32
        $region31: #{tpu_custom_call.1} parent=27 // pred_region
          %s480 = smul.u32 4, %s22
        $region32: #{tpu_custom_call.1} parent=27 // pred_fallthru
          _
        // Predicated region
        $region33: #{tpu_custom_call.1} parent=27 // pred_check
          %p481 = pneg %p113
        $region34: #{tpu_custom_call.1} parent=27 // pred_check_branch
          %483 = sbr.rel (%p481) target = $region36
        $region35: #{tpu_custom_call.1} parent=27 // pred_region
          %485 = vsyncadd %s470, 0
          %s486 = scalar_lea.hbm %s3, %s22
          %s488 = sshll.u32 %s472, 4
          %s489 = int_to_ptr.vmem [resolvable:$true] %s488
          %s490 = sshll.u32 %s486, 4
          %s491 = int_to_ptr.hbm [resolvable:$true] %s490
          %493 = dma.vmem_to_hbm [thread:$0]  %s489, 16, %s491, %s470
        $region36: #{tpu_custom_call.1} parent=27 // pred_fallthru
          _
        // Predicated region
        $region37: #{tpu_custom_call.1} parent=27 // pred_check
          %p494 = pneg %p139
        $region38: #{tpu_custom_call.1} parent=27 // pred_check_branch
          %496 = sbr.rel (%p494) target = $region40
        $region39: #{tpu_custom_call.1} parent=27 // pred_region
          %498 = vsyncadd %s474, 0
          %s499 = scalar_lea.hbm %s4, %s22
          %s501 = sshll.u32 %s476, 4
          %s502 = int_to_ptr.vmem [resolvable:$true] %s501
          %s503 = sshll.u32 %s499, 4
          %s504 = int_to_ptr.hbm [resolvable:$true] %s503
          %506 = dma.vmem_to_hbm [thread:$0]  %s502, 16, %s504, %s474
        $region40: #{tpu_custom_call.1} parent=27 // pred_fallthru
          _
      $region28: #{tpu_custom_call.1} parent=5 // pred_fallthru
        _
      %p507 = scmp.le.s32.totalorder 2, %s17
      // Predicated region
      $region41: #{tpu_custom_call.1} parent=5 // pred_check
        %p508 = pneg %p507
      $region42: #{tpu_custom_call.1} parent=5 // pred_check_branch
        %510 = sbr.rel (%p508) target = $region44
      $region43: #{tpu_custom_call.1} parent=5 // pred_region
        %s511 = ssub.s32 %s17, 2
        // Predicated region
        $region45: #{tpu_custom_call.1} parent=43 // pred_check
          %p512 = pneg %p93
        $region46: #{tpu_custom_call.1} parent=43 // pred_check_branch
          %514 = sbr.rel (%p512) target = $region48
        $region47: #{tpu_custom_call.1} parent=43 // pred_region
          %s515 = smul.u32 4, %s23
          %p516 = scmp.lt.s32.totalorder %s515, 7
          %s517 = scalar_select %p516, %s515, 7
          %s518 = smul.addr %s517, 8
          %s519 = scalar_lea.vmem %s2, %s518
        $region48: #{tpu_custom_call.1} parent=43 // pred_fallthru
          _
        // Predicated region
        $region49: #{tpu_custom_call.1} parent=43 // pred_check
          %p520 = pneg %p119
        $region50: #{tpu_custom_call.1} parent=43 // pred_check_branch
          %522 = sbr.rel (%p520) target = $region52
        $region51: #{tpu_custom_call.1} parent=43 // pred_region
          %s523 = sand.u32 %s104, 1
          %s524 = scalar_lea.sflag [#allocation3], %s523
          %s525 = sand.u32 %s104, 1
          %s526 = scalar_lea.vmem [#allocation2], %s525
          %528 = dma.done %s524, 16
        $region52: #{tpu_custom_call.1} parent=43 // pred_fallthru
          _
        // Predicated region
        $region53: #{tpu_custom_call.1} parent=43 // pred_check
          %p529 = pneg %p145
        $region54: #{tpu_custom_call.1} parent=43 // pred_check_branch
          %531 = sbr.rel (%p529) target = $region56
        $region55: #{tpu_custom_call.1} parent=43 // pred_region
          %s532 = sand.u32 %s130, 1
          %s533 = scalar_lea.sflag [#allocation5], %s532
          %s534 = sand.u32 %s130, 1
          %s535 = scalar_lea.vmem [#allocation4], %s534
          %537 = dma.done %s533, 16
        $region56: #{tpu_custom_call.1} parent=43 // pred_fallthru
          _
      $region44: #{tpu_custom_call.1} parent=5 // pred_fallthru
        _
    $region6: #{tpu_custom_call.1} parent=1 // loop_footer
      %s21 = sadd.s32 1, %s17
    $region7: #{tpu_custom_call.1} parent=1 // loop_footer_branch
      %16 = sbr.rel target = $region3
    $region8: #{tpu_custom_call.1} parent=1 // loop_exit
      _
    %538 = vsyncpa [#allocation3], 1
    %s539 = scalar_lea.sflag [#allocation3], 1
    %540 = vsyncpa %s539, 1
    %541 = vsyncpa [#allocation5], 1
    %s542 = scalar_lea.sflag [#allocation5], 1
    %543 = vsyncpa %s542, 1

</llo_original>
